<compile_context>
chip_gen: v5e
topology: v5e:2x2
jax: 0.10.0
libtpu: 0.0.40
codegen_flags: <defaults>
</compile_context>

<pallas_src>
import functools
from typing import NamedTuple, Optional

import jax
import jax.numpy as jnp
import numpy as np
from jax.experimental import pallas as pl
from jax.experimental.pallas import tpu as pltpu

LANE = 128


def _round_up(x, m):
    return (x + m - 1) // m * m


def _vmem_capacity_bytes():
    try:
        info = pltpu.get_tpu_info()
        cap = getattr(info, "vmem_capacity_bytes", None)
        if cap:
            return int(cap)
    except Exception:
        pass
    return 64 * 1024 * 1024  # conservative (v7x per-TC)


def _choose_tiles(num_nodes, block_m, block_k):
    """Pick (tm, tk, n_pad): tm|n_pad, tk|n_pad, tk%128==0, tm%8==0, pad = max tile."""
    block_m = max(LANE, _round_up(block_m, LANE))
    block_k = max(LANE, _round_up(block_k, LANE))
    n_p = _round_up(num_nodes, LANE)
    tm = min(block_m, n_p)
    tk = min(block_k, n_p)
    # Force one tile to be a multiple of the other so n_pad = max(tm, tk), not lcm.
    if tk >= tm:
        tk -= tk % tm
    else:
        tm -= tm % tk
    n_pad = _round_up(n_p, max(tm, tk))
    # v7x megacore: make sure the "parallel" dst axis has >= 2 tiles when possible.
    if n_pad // tm < 2 and n_pad >= 16 and (n_pad // 2) % 8 == 0:
        tm = n_pad // 2
    return tm, tk, n_pad


class Graph(NamedTuple):
    adj: jax.Array    # (n_pad, n_pad) agg_dtype, adj[dst, src] = multiplicity
    norm: jax.Array   # (n_pad, 1) float32
    n_pad: int


def build_graph(edge_index, num_nodes, *, block_m=512, block_k=1024,
                agg_dtype=jnp.bfloat16):
    """Build (and reuse across layers) the dense adjacency + symmetric norm."""
    _, _, n_pad = _choose_tiles(num_nodes, block_m, block_k)
    src, dst = edge_index[0], edge_index[1]
    # TODO(synk): edge-indexed scatter-add / degree counting has no clean dense Pallas
    # equivalent; the dense adjacency is O(N^2) XLA-scatter glue. For large sparse graphs
    # this should become block-sparse: CSR-style (dst_tile, src_tile) nonzero lists
    # scalar-prefetched into SMEM drive the A/H index_maps and empty tiles are skipped.
    adj = jnp.zeros((n_pad, n_pad), agg_dtype).at[dst, src].add(1.0)
    deg = jnp.zeros((n_pad,), jnp.float32).at[src].add(1.0)
    norm = jax.lax.rsqrt(jnp.maximum(deg, 1.0)).reshape(n_pad, 1)
    return Graph(adj=adj, norm=norm, n_pad=n_pad)


# ---------------------------------------------------------------------------
# prep kernels: build H, the operand streamed against the adjacency
# ---------------------------------------------------------------------------
def _transform_kernel(feat_ref, norm_ref, w_ref, h_ref):
    """H = (feat * norm) @ W   (in_feats > out_feats branch). Dot in W's dtype."""
    f = (feat_ref[...].astype(jnp.float32) * norm_ref[...]).astype(w_ref.dtype)
    h = jnp.dot(f, w_ref[...], preferred_element_type=jnp.float32)
    h_ref[...] = h.astype(h_ref.dtype)


def _scale_kernel(feat_ref, norm_ref, h_ref):
    """H = feat * norm   (in_feats <= out_feats branch)."""
    h_ref[...] = (feat_ref[...].astype(jnp.float32) * norm_ref[...]).astype(h_ref.dtype)


# ---------------------------------------------------------------------------
# main aggregation kernels: AGG = A @ H with f32 accumulator
# ---------------------------------------------------------------------------
def _h_block(h_ref, tk, h_resident):
    if h_resident:
        start = pl.multiple_of(pl.program_id(1) * tk, tk)
        return h_ref[pl.ds(start, tk), :]
    return h_ref[...]


def _agg_kernel(adj_ref, h_ref, norm_ref, bias_ref, out_ref, acc_ref, *,
                activation, tk, h_resident):
    k = pl.program_id(1)

    @pl.when(k == 0)
    def _():
        acc_ref[...] = jnp.zeros_like(acc_ref)

    acc_ref[...] += jnp.dot(adj_ref[...], _h_block(h_ref, tk, h_resident),
                            preferred_element_type=jnp.float32)

    @pl.when(k == pl.num_programs(1) - 1)
    def _():
        rst = acc_ref[...] * norm_ref[...] + bias_ref[...].astype(jnp.float32)
        if activation is not None:
            rst = activation(rst)
        out_ref[...] = rst.astype(out_ref.dtype)


def _agg_then_transform_kernel(adj_ref, h_ref, w_ref, norm_ref, bias_ref,
                               out_ref, acc_ref, *, activation, tk, h_resident):
    k = pl.program_id(1)

    @pl.when(k == 0)
    def _():
        acc_ref[...] = jnp.zeros_like(acc_ref)

    acc_ref[...] += jnp.dot(adj_ref[...], _h_block(h_ref, tk, h_resident),
                            preferred_element_type=jnp.float32)

    @pl.when(k == pl.num_programs(1) - 1)
    def _():
        w = w_ref[...]
        rst = jnp.dot(acc_ref[...].astype(w.dtype), w,
                      preferred_element_type=jnp.float32)
        rst = rst * norm_ref[...] + bias_ref[...].astype(jnp.float32)
        if activation is not None:
            rst = activation(rst)
        out_ref[...] = rst.astype(out_ref.dtype)


# ---------------------------------------------------------------------------
# wrapper
# ---------------------------------------------------------------------------
def graph_conv(feat, edge_index, weight, bias, *, num_nodes, activation=None,
               agg_dtype=jnp.bfloat16, block_m=512, block_k=1024,
               graph: Optional[Graph] = None):
    """GraphConv.forward. feat [N,in], edge_index [2,E] int32, weight [in,out], bias [out].

    agg_dtype: dtype of adjacency / streamed H / matmul operands (bf16 default; edge
      multiplicities up to 256 are exact in bf16; use jnp.float32 for bit-tight results).
    block_m / block_k: dst-row and src-contraction tile targets (multiples of 128); the
      wrapper shrinks them automatically to fit the per-generation VMEM budget.
    graph: optional precomputed Graph (build_graph) reused across layers for static graphs.
    """
    N = num_nodes
    in_feats = feat.shape[-1]
    out_feats = weight.shape[-1]

    tm, tk, n_pad = _choose_tiles(N, block_m, block_k)
    if graph is None:
        graph = build_graph(edge_index, N, block_m=block_m, block_k=block_k,
                            agg_dtype=agg_dtype)
    if graph.n_pad != n_pad:
        raise ValueError("precomputed graph was built with different block_m/block_k")
    if graph.adj.dtype != jnp.dtype(agg_dtype):
        raise ValueError("precomputed graph dtype does not match agg_dtype")
    adj, norm = graph.adj, graph.norm

    fin_p = _round_up(in_feats, LANE)
    fout_p = _round_up(out_feats, LANE)
    in_gt_out = in_feats > out_feats
    fh = fout_p if in_gt_out else fin_p
    acc_cols = fout_p if in_gt_out else fin_p

    agg_b = jnp.dtype(agg_dtype).itemsize
    out_b = jnp.dtype(feat.dtype).itemsize

    # ---- VMEM budgeting (v7x 64 MiB, v5e/v6e 128 MiB physical; scoped default is lower) --
    cap = _vmem_capacity_bytes()
    budget = int(0.7 * min(cap, 128 << 20))
    h_resident = (n_pad * fh * agg_b) <= min(budget // 4, 16 << 20)

    def _main_est(tm_, tk_, h_res):
        est = 2 * tm_ * tk_ * agg_b                                   # adj (double-buffered)
        est += (2 * n_pad if h_res else 2 * tk_) * fh * agg_b          # H
        if not in_gt_out:
            est += 2 * fin_p * fout_p * agg_b                          # resident W
        est += 2 * tm_ * LANE * 4                                      # norm (lane-padded)
        est += 2 * 8 * fout_p * 4                                      # bias (sublane-padded)
        est += 2 * tm_ * fout_p * out_b                                # out
        est += tm_ * acc_cols * 4                                      # acc scratch
        return est

    while _main_est(tm, tk, h_resident) > budget:
        if h_resident:
            h_resident = False
        elif tk % 256 == 0:
            tk //= 2
        elif tm % 16 == 0 and tm >= 16:
            tm //= 2
        else:
            break

    prep_est = (2 * tm * fin_p * 4 + 2 * tm * LANE * 4 + 2 * tm * fh * agg_b
                + (2 * fin_p * fout_p * agg_b if in_gt_out else 0))
    est = max(_main_est(tm, tk, h_resident), prep_est)
    vmem_limit = int(min(cap, max(32 << 20, int(est * 1.5) + (8 << 20))))

    # ---- pad operands to lane-dense shapes -----------------------------------------------
    feat_p = jnp.pad(feat, ((0, n_pad - N), (0, fin_p - in_feats)))
    w_p = jnp.pad(weight, ((0, fin_p - in_feats), (0, fout_p - out_feats))).astype(agg_dtype)
    bias_p = jnp.pad(bias.astype(jnp.float32).reshape(1, -1),
                     ((0, 0), (0, fout_p - out_feats)))

    # ---- prep pass: materialize H once (hoisted out of the tiled aggregation) ------------
    if in_gt_out:
        prep_kernel = _transform_kernel
        prep_inputs = (feat_p, norm, w_p)
        prep_in_specs = [pl.BlockSpec((tm, fin_p), lambda i: (i, 0)),
                         pl.BlockSpec((tm, 1), lambda i: (i, 0)),
                         pl.BlockSpec((fin_p, fout_p), lambda i: (0, 0))]
    else:
        prep_kernel = _scale_kernel
        prep_inputs = (feat_p, norm)
        prep_in_specs = [pl.BlockSpec((tm, fin_p), lambda i: (i, 0)),
                         pl.BlockSpec((tm, 1), lambda i: (i, 0))]

    h = pl.pallas_call(
        prep_kernel,
        out_shape=jax.ShapeDtypeStruct((n_pad, fh), agg_dtype),
        grid=(n_pad // tm,),
        in_specs=prep_in_specs,
        out_specs=pl.BlockSpec((tm, fh), lambda i: (i, 0)),
        compiler_params=pltpu.CompilerParams(
            dimension_semantics=("parallel",), vmem_limit_bytes=vmem_limit),
    )(*prep_inputs)

    # ---- main pass: tiled aggregation (+ trailing weight matmul if in <= out) ------------
    grid = (n_pad // tm, n_pad // tk)
    h_spec = (pl.BlockSpec((n_pad, fh), lambda i, k: (0, 0)) if h_resident
              else pl.BlockSpec((tk, fh), lambda i, k: (k, 0)))

    if in_gt_out:
        kernel = functools.partial(_agg_kernel, activation=activation,
                                   tk=tk, h_resident=h_resident)
        inputs = (adj, h, norm, bias_p)
        in_specs = [pl.BlockSpec((tm, tk), lambda i, k: (i, k)),
                    h_spec,
                    pl.BlockSpec((tm, 1), lambda i, k: (i, 0)),
                    pl.BlockSpec((1, fout_p), lambda i, k: (0, 0))]
    else:
        kernel = functools.partial(_agg_then_transform_kernel, activation=activation,
                                   tk=tk, h_resident=h_resident)
        inputs = (adj, h, w_p, norm, bias_p)
        in_specs = [pl.BlockSpec((tm, tk), lambda i, k: (i, k)),
                    h_spec,
                    pl.BlockSpec((fin_p, fout_p), lambda i, k: (0, 0)),
                    pl.BlockSpec((tm, 1), lambda i, k: (i, 0)),
                    pl.BlockSpec((1, fout_p), lambda i, k: (0, 0))]

    out_p = pl.pallas_call(
        kernel,
        out_shape=jax.ShapeDtypeStruct((n_pad, fout_p), feat.dtype),
        grid_spec=pltpu.PrefetchScalarGridSpec(
            num_scalar_prefetch=0,
            grid=grid,
            in_specs=in_specs,
            out_specs=pl.BlockSpec((tm, fout_p), lambda i, k: (i, 0)),
            scratch_shapes=[pltpu.VMEM((tm, acc_cols), jnp.float32)]),
        compiler_params=pltpu.CompilerParams(
            dimension_semantics=("parallel", "arbitrary"),
            vmem_limit_bytes=vmem_limit),
    )(*inputs)

    return out_p[:N, :out_feats]


# ---------------------------------------------------------------------------
# pure-JAX reference mirroring the PyTorch module
# ---------------------------------------------------------------------------
def graph_conv_ref(feat, edge_index, weight, bias, *, num_nodes, activation=None):
    src, dst = edge_index[0], edge_index[1]
    deg = jnp.zeros((num_nodes,), jnp.float32).at[src].add(1.0)
    norm = jax.lax.rsqrt(jnp.maximum(deg, 1.0)).reshape(-1, 1)
    f = feat.astype(jnp.float32) * norm
    if feat.shape[-1] > weight.shape[-1]:
        f = f @ weight.astype(jnp.float32)
        rst = jnp.zeros((num_nodes, f.shape[-1]), jnp.float32).at[dst].add(f[src])
    else:
        rst = jnp.zeros((num_nodes, f.shape[-1]), jnp.float32).at[dst].add(f[src])
        rst = rst @ weight.astype(jnp.float32)
    rst = rst * norm + bias.reshape(1, -1).astype(jnp.float32)
    if activation is not None:
        rst = activation(rst)
    return rst


if __name__ == "__main__":
    N, E = 16, 40
    key = jax.random.PRNGKey(0)
    key, k_edge = jax.random.split(key)
    edge_index = jax.random.randint(k_edge, (2, E), 0, N, dtype=jnp.int32)

    # Static graph across layers: build adjacency / norm once per agg dtype and reuse.
    graph_f32 = build_graph(edge_index, N, agg_dtype=jnp.float32)
    graph_bf16 = build_graph(edge_index, N, agg_dtype=jnp.bfloat16)

    # Two cases exercise both branches of GraphConv.forward:
    #   in > out  -> transform-then-aggregate
    #   in <= out -> aggregate-then-transform (+ activation)
    cases = [
        dict(in_feats=32, out_feats=8, activation=None),
        dict(in_feats=8, out_feats=32, activation=jax.nn.relu),
    ]

    for case in cases:
        key, k_feat, k_w, k_b = jax.random.split(key, 4)
        feat = jax.random.normal(k_feat, (N, case["in_feats"]), dtype=jnp.float32)
        weight = jax.random.normal(
            k_w, (case["in_feats"], case["out_feats"]), dtype=jnp.float32) * 0.1
        bias = jax.random.normal(k_b, (case["out_feats"],), dtype=jnp.float32) * 0.1

        ref = jax.block_until_ready(
            graph_conv_ref(feat, edge_index, weight, bias,
                           num_nodes=N, activation=case["activation"]))

        # f32 aggregation path: tight correctness check (all matmul operands stay f32).
        out_f32 = jax.block_until_ready(
            graph_conv(feat, edge_index, weight, bias, num_nodes=N,
                       activation=case["activation"], agg_dtype=jnp.float32,
                       graph=graph_f32))
        assert out_f32.shape == (N, case["out_feats"])
        np.testing.assert_allclose(np.asarray(out_f32), np.asarray(ref),
                                   rtol=1e-4, atol=1e-4)

        # bf16 aggregation path (default perf path): bf16 operands -> looser tolerance.
        out_bf16 = jax.block_until_ready(
            graph_conv(feat, edge_index, weight, bias, num_nodes=N,
                       activation=case["activation"], agg_dtype=jnp.bfloat16,
                       graph=graph_bf16))
        assert out_bf16.shape == (N, case["out_feats"])
        np.testing.assert_allclose(np.asarray(out_bf16), np.asarray(ref),
                                   rtol=2e-2, atol=2e-2)

    print("KERNEL_OK")
</pallas_src>

<mosaic_0001>
module attributes {stable_mosaic.version = 11 : i64} {
  func.func @_transform_kernel(%arg0: i32, %arg1: memref<64x128xf32, #tpu.memory_space<vmem>>, %arg2: memref<64x1xf32, #tpu.memory_space<vmem>>, %arg3: memref<128x128xf32, #tpu.memory_space<vmem>>, %arg4: memref<64x128xf32, #tpu.memory_space<vmem>>) attributes {dimension_semantics = [#tpu.dimension_semantics<parallel>], iteration_bounds = array<i64: 2>, scalar_prefetch = 0 : i64, scratch_operands = 0 : i64, tpu.core_type = #tpu.core_type<tc>, window_params = [{transform_indices = @transform_0, window_bounds = array<i64: 64, 128>}, {transform_indices = @transform_1, window_bounds = array<i64: 64, 1>}, {pipeline_mode = #tpu.pipeline_mode<synchronous>, transform_indices = @transform_2, window_bounds = array<i64: 128, 128>}, {transform_indices = @transform_3, window_bounds = array<i64: 64, 128>}]} {
    %c0 = arith.constant 0 : index
    %c0_0 = arith.constant 0 : index
    %0 = vector.load %arg1[%c0, %c0_0] : memref<64x128xf32, #tpu.memory_space<vmem>>, vector<64x128xf32>
    %c0_1 = arith.constant 0 : index
    %c0_2 = arith.constant 0 : index
    %1 = vector.load %arg2[%c0_1, %c0_2] : memref<64x1xf32, #tpu.memory_space<vmem>>, vector<64x1xf32>
    %2 = vector.broadcast %1 : vector<64x1xf32> to vector<64x128xf32>
    %3 = arith.mulf %0, %2 : vector<64x128xf32>
    %c0_3 = arith.constant 0 : index
    %c0_4 = arith.constant 0 : index
    %4 = vector.load %arg3[%c0_3, %c0_4] : memref<128x128xf32, #tpu.memory_space<vmem>>, vector<128x128xf32>
    %cst = arith.constant dense<0.000000e+00> : vector<64x128xf32>
    %5 = tpu.matmul %3, %4, %cst {dimension_numbers = #tpu.dot_dimension_numbers<[1], [0], [0], [1], [0, 0, 1, 1], [], []>} : vector<64x128xf32>, vector<128x128xf32>, vector<64x128xf32> -> vector<64x128xf32>
    %c0_5 = arith.constant 0 : index
    %c0_6 = arith.constant 0 : index
    %6 = vector.load %arg4[%c0_5, %c0_6] : memref<64x128xf32, #tpu.memory_space<vmem>>, vector<64x128xf32>
    tpu.vector_store %arg4[%c0_5, %c0_6], %5 {strides = array<i32>} : memref<64x128xf32, #tpu.memory_space<vmem>>, vector<64x128xf32>,
    return
  }
  func.func @transform_0(%arg0: i32) -> (i32, i32) {
    %c0_i32 = arith.constant 0 : i32
    %c0_i32_0 = arith.constant 0 : i32
    return %arg0, %c0_i32 : i32, i32
  }
  func.func @transform_1(%arg0: i32) -> (i32, i32) {
    %c0_i32 = arith.constant 0 : i32
    %c0_i32_0 = arith.constant 0 : i32
    return %arg0, %c0_i32 : i32, i32
  }
  func.func @transform_2(%arg0: i32) -> (i32, i32) {
    %c0_i32 = arith.constant 0 : i32
    %c0_i32_0 = arith.constant 0 : i32
    %c0_i32_1 = arith.constant 0 : i32
    return %c0_i32, %c0_i32_0 : i32, i32
  }
  func.func @transform_3(%arg0: i32) -> (i32, i32) {
    %c0_i32 = arith.constant 0 : i32
    %c0_i32_0 = arith.constant 0 : i32
    return %arg0, %c0_i32 : i32, i32
  }
}

</mosaic_0001>

<llo_original>
// kernel: tpu_custom_call.1
$region0: #{tpu_custom_call.1}
  #allocation0 [shape = 'u32[]', space=smem, size = 0x4, offset = 0x4, fixed_abs, tag = 'smem constant byte address 0x4 - core index']
  #allocation1 [shape = 'u32[72,128]{1,0:T(1,128)}', space=vmem, size = 0x9000, scoped, tag = 'internal scratch']
  %s0 = inlined_call_operand.vmem [shape: f32[128,128], index: 0, kind: input, shape index: {}]
  %s1 = inlined_call_operand.vmem [shape: f32[128,1], index: 1, kind: input, shape index: {}]
  %s2 = inlined_call_operand.hbm [shape: f32[128,128], index: 2, kind: input, shape index: {}]
  %s3 = inlined_call_operand.hbm [shape: f32[128,128], index: 3, kind: output, shape index: {}]
  %s4 = sld [smem:[#allocation0]]
  $region49: #{tpu_custom_call.1} parent=0
    _
  %s6 = ssub.s32 1, %s4
  %s7 = scalar_select 0, %s6, %s4
  $region1: #{tpu_custom_call.1} parent=0
    #allocation2 [shape = 'u8[65536]{0}', space=vmem, size = 0x10000, scoped, tag = 'input window, operand 2, single buffered']
    #allocation3 [shape = 's32[2]{0}', space=sflag, size = 0x8, scoped, tag = 'scoped memory for tpu_custom_call.1']
    #allocation4 [shape = 's32[2]{0}', space=sflag, size = 0x8, scoped, tag = 'scoped memory for tpu_custom_call.1']
    #allocation5 [shape = 'u8[65536]{0}', space=vmem, size = 0x10000, scoped, tag = 'output window, operand 0']
    %8 = vsyncpa [#allocation3], 0
    %9 = vsyncpa [#allocation4], 0
    %s10 = scalar_lea.sflag [#allocation4], 1
    %11 = vsyncpa %s10, 0
    loop: start=0, step=1, limit=4
    $region2: #{tpu_custom_call.1} parent=1 // loop_pre_header
      _
    $region3: #{tpu_custom_call.1} parent=1 // loop_header
      %s13 = sphi 0, %s17
      %p14 = scmp.ge.s32.totalorder %s13, 4
      %s23 = sphi 0, %s25
      %s26 = sphi 0, %s23
      %s27 = sphi 0, %s26
      %s43 = sphi 0, %s27
      %s49 = sphi 0, %s51
      %s52 = sphi 0, %s49
      %s53 = sphi 0, %s52
      %s69 = sphi 0, %s53
      %s73 = sphi 0, %s73
      %s75 = sphi 0, %s73
      %s76 = sphi 0, %s75
      %s90 = sphi 0, %s76
      %s96 = sphi 0, %s98
      %s99 = sphi 0, %s96
      %s100 = sphi 0, %s99
      %s116 = sphi 0, %s100
    $region4: #{tpu_custom_call.1} parent=1 // loop_header_branch
      %16 = sbr.rel (%p14) target = $region8
    $region5: #{tpu_custom_call.1} parent=1 // loop_body
      %s18 = ssub.s32 %s13, 1
      %s19 = ssub.s32 %s13, 2
      %s20 = sadd.s32 %s13, 1
      %s21 = ssub.s32 %s13, %s20
      %p22 = scmp.eq.s32.totalorder %s21, 0
      %s24 = sadd.s32 %s23, 1
      %s25 = scalar_select %p22, %s23, %s24
      %p28 = pneg %p22
      %p29 = scmp.eq.s32.totalorder %s13, 1
      %p30 = por %p28, %p29
      %p31 = scmp.ne.s32.totalorder %s23, %s26
      %p32 = scmp.eq.s32.totalorder %s13, 0
      %p33 = por %p31, %p32
      %p34 = scmp.ne.s32.totalorder %s23, %s26
      %p35 = scmp.eq.s32.totalorder %s18, 1
      %p36 = por %p34, %p35
      %p37 = scmp.ne.s32.totalorder %s26, %s27
      %p38 = scmp.eq.s32.totalorder %s18, 0
      %p39 = por %p37, %p38
      %p40 = scmp.ne.s32.totalorder %s26, %s27
      %p41 = scmp.eq.s32.totalorder %s19, 1
      %p42 = por %p40, %p41
      %p44 = scmp.ne.s32.totalorder %s27, %s43
      %p45 = scmp.eq.s32.totalorder %s19, 0
      %p46 = por %p44, %p45
      %s47 = ssub.s32 %s13, %s20
      %p48 = scmp.eq.s32.totalorder %s47, 0
      %s50 = sadd.s32 %s49, 1
      %s51 = scalar_select %p48, %s49, %s50
      %p54 = pneg %p48
      %p55 = scmp.eq.s32.totalorder %s13, 1
      %p56 = por %p54, %p55
      %p57 = scmp.ne.s32.totalorder %s49, %s52
      %p58 = scmp.eq.s32.totalorder %s13, 0
      %p59 = por %p57, %p58
      %p60 = scmp.ne.s32.totalorder %s49, %s52
      %p61 = scmp.eq.s32.totalorder %s18, 1
      %p62 = por %p60, %p61
      %p63 = scmp.ne.s32.totalorder %s52, %s53
      %p64 = scmp.eq.s32.totalorder %s18, 0
      %p65 = por %p63, %p64
      %p66 = scmp.ne.s32.totalorder %s52, %s53
      %p67 = scmp.eq.s32.totalorder %s19, 1
      %p68 = por %p66, %p67
      %p70 = scmp.ne.s32.totalorder %s53, %s69
      %p71 = scmp.eq.s32.totalorder %s19, 0
      %p72 = por %p70, %p71
      %s74 = sadd.s32 %s73, 1
      %p77 = scmp.eq.s32.totalorder %s13, 1
      %p78 = scmp.ne.s32.totalorder %s73, %s75
      %p79 = scmp.eq.s32.totalorder %s13, 0
      %p80 = por %p78, %p79
      %p81 = scmp.ne.s32.totalorder %s73, %s75
      %p82 = scmp.eq.s32.totalorder %s18, 1
      %p83 = por %p81, %p82
      %p84 = scmp.ne.s32.totalorder %s75, %s76
      %p85 = scmp.eq.s32.totalorder %s18, 0
      %p86 = por %p84, %p85
      %p87 = scmp.ne.s32.totalorder %s75, %s76
      %p88 = scmp.eq.s32.totalorder %s19, 1
      %p89 = por %p87, %p88
      %p91 = scmp.ne.s32.totalorder %s76, %s90
      %p92 = scmp.eq.s32.totalorder %s19, 0
      %p93 = por %p91, %p92
      %s94 = ssub.s32 %s13, %s20
      %p95 = scmp.eq.s32.totalorder %s94, 0
      %s97 = sadd.s32 %s96, 1
      %s98 = scalar_select %p95, %s96, %s97
      %p101 = pneg %p95
      %p102 = scmp.eq.s32.totalorder %s13, 1
      %p103 = por %p101, %p102
      %p104 = scmp.ne.s32.totalorder %s96, %s99
      %p105 = scmp.eq.s32.totalorder %s13, 0
      %p106 = por %p104, %p105
      %p107 = scmp.ne.s32.totalorder %s96, %s99
      %p108 = scmp.eq.s32.totalorder %s18, 1
      %p109 = por %p107, %p108
      %p110 = scmp.ne.s32.totalorder %s99, %s100
      %p111 = scmp.eq.s32.totalorder %s18, 0
      %p112 = por %p110, %p111
      %p113 = scmp.ne.s32.totalorder %s99, %s100
      %p114 = scmp.eq.s32.totalorder %s19, 1
      %p115 = por %p113, %p114
      %p117 = scmp.ne.s32.totalorder %s100, %s116
      %p118 = scmp.eq.s32.totalorder %s19, 0
      %p119 = por %p117, %p118
      %p120 = scmp.le.s32.totalorder 1, %s13
      %p121 = scmp.lt.s32.totalorder %s13, 3
      %p122 = pnand %p120, %p121
      %p123 = pneg %p122
      // Predicated region
      $region9: #{tpu_custom_call.1} parent=5 // pred_check
        _
      $region10: #{tpu_custom_call.1} parent=5 // pred_check_branch
        %125 = sbr.rel (%p122) target = $region12
      $region11: #{tpu_custom_call.1} parent=5 // pred_region
        %s126 = ssub.s32 %s13, 1
        // Predicated region
        $region13: #{tpu_custom_call.1} parent=11 // pred_check
          %p127 = pneg %p86
        $region14: #{tpu_custom_call.1} parent=11 // pred_check_branch
          %129 = sbr.rel (%p127) target = $region16
        $region15: #{tpu_custom_call.1} parent=11 // pred_region
          %131 = vsyncadd [#allocation3], 0
          %s132 = sshll.u32 %s2, 4
          %s133 = int_to_ptr.hbm [resolvable:$true] %s132
          %s134 = sshll.u32 [#allocation2], 4
          %s135 = int_to_ptr.vmem [resolvable:$true] %s134
          %140 = dma.hbm_to_vmem [thread:$0]  %s133, 2048, %s135, [#allocation3], 128, 128, 8
        $region16: #{tpu_custom_call.1} parent=11 // pred_fallthru
          _
      $region12: #{tpu_custom_call.1} parent=5 // pred_fallthru
        _
      %p141 = scmp.lt.s32.totalorder %s13, 2
      // Predicated region
      $region17: #{tpu_custom_call.1} parent=5 // pred_check
        %p142 = pneg %p141
      $region18: #{tpu_custom_call.1} parent=5 // pred_check_branch
        %144 = sbr.rel (%p142) target = $region20
      $region19: #{tpu_custom_call.1} parent=5 // pred_region
        // Predicated region
        $region21: #{tpu_custom_call.1} parent=19 // pred_check
          %p145 = pneg %p33
        $region22: #{tpu_custom_call.1} parent=19 // pred_check_branch
          %147 = sbr.rel (%p145) target = $region24
        $region23: #{tpu_custom_call.1} parent=19 // pred_region
          %s148 = smul.u32 8, %s13
          %p149 = scmp.lt.s32.totalorder %s148, 15
          %s150 = scalar_select %p149, %s148, 15
          %s151 = smul.addr %s150, 8
          %s152 = scalar_lea.vmem %s0, %s151
          %s153 = smul.u32 8, %s13
        $region24: #{tpu_custom_call.1} parent=19 // pred_fallthru
          _
        // Predicated region
        $region25: #{tpu_custom_call.1} parent=19 // pred_check
          %p154 = pneg %p59
        $region26: #{tpu_custom_call.1} parent=19 // pred_check_branch
          %156 = sbr.rel (%p154) target = $region28
        $region27: #{tpu_custom_call.1} parent=19 // pred_region
          %s157 = smul.u32 8, %s13
          %p158 = scmp.lt.s32.totalorder %s157, 15
          %s159 = scalar_select %p158, %s157, 15
          %s160 = smul.addr %s159, 8
          %s161 = scalar_lea.vmem %s1, %s160
          %s162 = smul.u32 8, %s13
        $region28: #{tpu_custom_call.1} parent=19 // pred_fallthru
          _
      $region20: #{tpu_custom_call.1} parent=5 // pred_fallthru
        _
      %p163 = scmp.le.s32.totalorder 1, %s13
      %p164 = scmp.lt.s32.totalorder %s13, 3
      %p165 = pnand %p163, %p164
      %p166 = pneg %p165
      // Predicated region
      $region29: #{tpu_custom_call.1} parent=5 // pred_check
        _
      $region30: #{tpu_custom_call.1} parent=5 // pred_check_branch
        %168 = sbr.rel (%p165) target = $region32
      $region31: #{tpu_custom_call.1} parent=5 // pred_region
        %s169 = ssub.s32 %s13, 1
        // Predicated region
        $region33: #{tpu_custom_call.1} parent=31 // pred_check
          %p170 = pneg %p86
        $region34: #{tpu_custom_call.1} parent=31 // pred_check_branch
          %172 = sbr.rel (%p170) target = $region36
        $region35: #{tpu_custom_call.1} parent=31 // pred_region
          %174 = dma.done [#allocation3], 2048
        $region36: #{tpu_custom_call.1} parent=31 // pred_fallthru
          _
        %s175 = smul.u32 8, %s18
        %p176 = scmp.lt.s32.totalorder %s175, 15
        %s177 = scalar_select %p176, %s175, 15
        %s178 = smul.addr %s177, 8
        %s179 = scalar_lea.vmem %s0, %s178
        %p180 = pneg %p39
        %p181 = pneg %p36
        %s182 = smul.u32 8, %s18
        %p183 = scmp.lt.s32.totalorder %s182, 15
        %s184 = scalar_select %p183, %s182, 15
        %s185 = smul.addr %s184, 8
        %s186 = scalar_lea.vmem %s1, %s185
        %p187 = pneg %p65
        %p188 = pneg %p62
        %p189 = pneg %p86
        %p190 = pneg %p83
        %p191 = pneg %p112
        %p192 = pneg %p109
        %s193 = sand.u32 %s99, 1
        %s194 = scalar_lea.sflag [#allocation4], %s193
        %s195 = sand.u32 %s99, 1
        %s196 = smul.addr %s195, 64
        %s197 = scalar_lea.vmem [#allocation5], %s196
        %s198 = smul.u32 8, %s18
        %p199 = scmp.lt.s32.totalorder %s198, 15
        %s200 = scalar_select %p199, %s198, 15
        %s201 = smul.addr %s200, 8
        %s202 = scalar_lea.vmem %s0, %s201
        %s203 = smul.u32 8, %s18
        %s204 = smul.u32 8, %s18
        %p205 = scmp.lt.s32.totalorder %s204, 15
        %s206 = scalar_select %p205, %s204, 15
        %s207 = smul.addr %s206, 8
        %s208 = scalar_lea.vmem %s1, %s207
        %s209 = smul.u32 8, %s18
        %s210 = smul.u32 8, %s18
        %v211 = vld [vmem:[%s202] sm:$0xff]
        %v212 = vld [vmem:[%s202 + $0x8] sm:$0xff]
        %v213 = vld [vmem:[%s202 + $0x10] sm:$0xff]
        %v214 = vld [vmem:[%s202 + $0x18] sm:$0xff]
        %v215 = vld [vmem:[%s202 + $0x20] sm:$0xff]
        %v216 = vld [vmem:[%s202 + $0x28] sm:$0xff]
        %v217 = vld [vmem:[%s202 + $0x30] sm:$0xff]
        %v218 = vld [vmem:[%s202 + $0x38] sm:$0xff]
        %v219 = vld [vmem:[%s208] sm:$0xff]
        %v220 = vld [vmem:[%s208 + $0x8] sm:$0xff]
        %v221 = vld [vmem:[%s208 + $0x10] sm:$0xff]
        %v222 = vld [vmem:[%s208 + $0x18] sm:$0xff]
        %v223 = vld [vmem:[%s208 + $0x20] sm:$0xff]
        %v224 = vld [vmem:[%s208 + $0x28] sm:$0xff]
        %v225 = vld [vmem:[%s208 + $0x30] sm:$0xff]
        %v226 = vld [vmem:[%s208 + $0x38] sm:$0xff]
        %228 = vset.pattern.permute.xlu0 0
        %229 = vperm.xlu0 %228, %v219
        %v230 = vpop.permute.xlu0 %229
        %233 = vset.pattern.permute.xlu0 0
        %234 = vperm.xlu0 %233, %v220
        %v235 = vpop.permute.xlu0 %234
        %238 = vset.pattern.permute.xlu0 0
        %239 = vperm.xlu0 %238, %v221
        %v240 = vpop.permute.xlu0 %239
        %243 = vset.pattern.permute.xlu0 0
        %244 = vperm.xlu0 %243, %v222
        %v245 = vpop.permute.xlu0 %244
        %248 = vset.pattern.permute.xlu0 0
        %249 = vperm.xlu0 %248, %v223
        %v250 = vpop.permute.xlu0 %249
        %253 = vset.pattern.permute.xlu0 0
        %254 = vperm.xlu0 %253, %v224
        %v255 = vpop.permute.xlu0 %254
        %258 = vset.pattern.permute.xlu0 0
        %259 = vperm.xlu0 %258, %v225
        %v260 = vpop.permute.xlu0 %259
        %263 = vset.pattern.permute.xlu0 0
        %264 = vperm.xlu0 %263, %v226
        %v265 = vpop.permute.xlu0 %264
        %v267 = vmul.f32 %v211, %v230
        %v268 = vmul.f32 %v212, %v235
        %v269 = vmul.f32 %v213, %v240
        %v270 = vmul.f32 %v214, %v245
        %v271 = vmul.f32 %v215, %v250
        %v272 = vmul.f32 %v216, %v255
        %v273 = vmul.f32 %v217, %v260
        %v274 = vmul.f32 %v218, %v265
        %v275 = vld [vmem:[#allocation2] sm:$0xff]
        %v276 = vld [vmem:[#allocation2 + $0x8] sm:$0xff]
        %v277 = vld [vmem:[#allocation2 + $0x10] sm:$0xff]
        %v278 = vld [vmem:[#allocation2 + $0x18] sm:$0xff]
        %v279 = vld [vmem:[#allocation2 + $0x20] sm:$0xff]
        %v280 = vld [vmem:[#allocation2 + $0x28] sm:$0xff]
        %v281 = vld [vmem:[#allocation2 + $0x30] sm:$0xff]
        %v282 = vld [vmem:[#allocation2 + $0x38] sm:$0xff]
        %v283 = vld [vmem:[#allocation2 + $0x40] sm:$0xff]
        %v284 = vld [vmem:[#allocation2 + $0x48] sm:$0xff]
        %v285 = vld [vmem:[#allocation2 + $0x50] sm:$0xff]
        %v286 = vld [vmem:[#allocation2 + $0x58] sm:$0xff]
        %v287 = vld [vmem:[#allocation2 + $0x60] sm:$0xff]
        %v288 = vld [vmem:[#allocation2 + $0x68] sm:$0xff]
        %v289 = vld [vmem:[#allocation2 + $0x70] sm:$0xff]
        %v290 = vld [vmem:[#allocation2 + $0x78] sm:$0xff]
        %291 = vmatpush.msra.mxu0 %v290
        %292 = vmatpush.msra.mxu0 %v289
        %293 = vmatpush.msra.mxu0 %v288
        %294 = vmatpush.msra.mxu0 %v287
        %295 = vmatpush.msra.mxu0 %v286
        %296 = vmatpush.msra.mxu0 %v285
        %297 = vmatpush.msra.mxu0 %v284
        %298 = vmatpush.msra.mxu0 %v283
        %299 = vmatpush.msra.mxu0 %v282
        %300 = vmatpush.msra.mxu0 %v281
        %301 = vmatpush.msra.mxu0 %v280
        %302 = vmatpush.msra.mxu0 %v279
        %303 = vmatpush.msra.mxu0 %v278
        %304 = vmatpush.msra.mxu0 %v277
        %305 = vmatpush.msra.mxu0 %v276
        %306 = vmatpush.msra.mxu0 %v275
        %307 = vmatmul.f32.gmra.mxu0 %v267
        %v308 = vpop.f32.mrf.mxu0
        %v309 = vadd.f32 0.0, %v308
        %310 = vmatmul.f32.gmra.mxu0 %v268
        %v311 = vpop.f32.mrf.mxu0
        %v312 = vadd.f32 0.0, %v311
        %313 = vmatmul.f32.gmra.mxu0 %v269
        %v314 = vpop.f32.mrf.mxu0
        %v315 = vadd.f32 0.0, %v314
        %316 = vmatmul.f32.gmra.mxu0 %v270
        %v317 = vpop.f32.mrf.mxu0
        %v318 = vadd.f32 0.0, %v317
        %319 = vmatmul.f32.gmra.mxu0 %v271
        %v320 = vpop.f32.mrf.mxu0
        %v321 = vadd.f32 0.0, %v320
        %322 = vmatmul.f32.gmra.mxu0 %v272
        %v323 = vpop.f32.mrf.mxu0
        %v324 = vadd.f32 0.0, %v323
        %325 = vmatmul.f32.gmra.mxu0 %v273
        %v326 = vpop.f32.mrf.mxu0
        %v327 = vadd.f32 0.0, %v326
        %328 = vmatmul.f32.gmra.mxu0 %v274
        %v329 = vpop.f32.mrf.mxu0
        %v330 = vadd.f32 0.0, %v329
        %331 = vdwg.mxu0
        %332 = vst [vmem:[%s197] sm:$0xff] %v309
        %333 = vst [vmem:[%s197 + $0x8] sm:$0xff] %v312
        %334 = vst [vmem:[%s197 + $0x10] sm:$0xff] %v315
        %335 = vst [vmem:[%s197 + $0x18] sm:$0xff] %v318
        %336 = vst [vmem:[%s197 + $0x20] sm:$0xff] %v321
        %337 = vst [vmem:[%s197 + $0x28] sm:$0xff] %v324
        %338 = vst [vmem:[%s197 + $0x30] sm:$0xff] %v327
        %339 = vst [vmem:[%s197 + $0x38] sm:$0xff] %v330
        %s340 = sand.u32 %s99, 1
        %s341 = scalar_lea.sflag [#allocation4], %s340
        %s342 = sand.u32 %s99, 1
        %s343 = smul.addr %s342, 64
        %s344 = scalar_lea.vmem [#allocation5], %s343
        // Predicated region
        $region37: #{tpu_custom_call.1} parent=31 // pred_check
          %p345 = pneg %p109
        $region38: #{tpu_custom_call.1} parent=31 // pred_check_branch
          %347 = sbr.rel (%p345) target = $region40
        $region39: #{tpu_custom_call.1} parent=31 // pred_region
          %s348 = smul.u32 8, %s18
          %350 = vsyncadd %s341, 0
          %s351 = smul.addr %s348, 8
          %s352 = scalar_lea.hbm %s3, %s351
          %s353 = sshll.u32 %s344, 4
          %s354 = int_to_ptr.vmem [resolvable:$true] %s353
          %s355 = sshll.u32 %s352, 4
          %s356 = int_to_ptr.hbm [resolvable:$true] %s355
          %361 = dma.vmem_to_hbm [thread:$0]  %s354, 1024, %s356, %s341, 128, 128, 8
        $region40: #{tpu_custom_call.1} parent=31 // pred_fallthru
          _
      $region32: #{tpu_custom_call.1} parent=5 // pred_fallthru
        _
      %p362 = scmp.le.s32.totalorder 2, %s13
      // Predicated region
      $region41: #{tpu_custom_call.1} parent=5 // pred_check
        %p363 = pneg %p362
      $region42: #{tpu_custom_call.1} parent=5 // pred_check_branch
        %365 = sbr.rel (%p363) target = $region44
      $region43: #{tpu_custom_call.1} parent=5 // pred_region
        %s366 = ssub.s32 %s13, 2
        // Predicated region
        $region45: #{tpu_custom_call.1} parent=43 // pred_check
          %p367 = pneg %p115
        $region46: #{tpu_custom_call.1} parent=43 // pred_check_branch
          %369 = sbr.rel (%p367) target = $region48
        $region47: #{tpu_custom_call.1} parent=43 // pred_region
          %s370 = sand.u32 %s100, 1
          %s371 = scalar_lea.sflag [#allocation4], %s370
          %s372 = sand.u32 %s100, 1
          %s373 = smul.addr %s372, 64
          %s374 = scalar_lea.vmem [#allocation5], %s373
          %376 = dma.done %s371, 1024
        $region48: #{tpu_custom_call.1} parent=43 // pred_fallthru
          _
      $region44: #{tpu_custom_call.1} parent=5 // pred_fallthru
        _
    $region6: #{tpu_custom_call.1} parent=1 // loop_footer
      %s17 = sadd.s32 1, %s13
    $region7: #{tpu_custom_call.1} parent=1 // loop_footer_branch
      %12 = sbr.rel target = $region3
    $region8: #{tpu_custom_call.1} parent=1 // loop_exit
      _
    %377 = vsyncpa [#allocation3], 1
    %s378 = scalar_lea.sflag [#allocation3], 1
    %379 = vsyncpa %s378, 1
    %380 = vsyncpa [#allocation4], 1
    %s381 = scalar_lea.sflag [#allocation4], 1
    %382 = vsyncpa %s381, 1

</llo_original>
